<compile_context>
chip_gen: v7x
topology: tpu7x:2x2x1
jax: 0.10.0
libtpu: 0.0.40
codegen_flags: <defaults>
</compile_context>

<pallas_src>
import functools

import jax
import jax.numpy as jnp
from jax import lax
from jax.experimental import pallas as pl
from jax.experimental.pallas import tpu as pltpu


_LANE = 512            # lane-dense last dim (multiple of 128)
_MAX_BLOCK_ROWS = 64   # 64 x 512 x 4B = 128 KiB per operand per buffer


def _round_up(x: int, m: int) -> int:
    return ((x + m - 1) // m) * m


def _tiling(n_elem: int, n_operands: int, max_block_rows: int):
    """Pick a (block_rows, rows_padded, n_tiles) tiling for flattened length n_elem."""
    rows_needed = -(-n_elem // _LANE)
    # keep double-buffered inputs under ~8 MiB of scoped VMEM (portable to v5e/v7x)
    budget_rows = (8 * 1024 * 1024) // max(1, n_operands * 2 * _LANE * 4)
    budget_rows = max(8, (budget_rows // 8) * 8)
    block_rows = min(max_block_rows, budget_rows, _round_up(rows_needed, 8))
    block_rows = max(8, (block_rows // 8) * 8)
    rows_padded = _round_up(max(rows_needed, 1), block_rows)
    n_tiles = rows_padded // block_rows
    return block_rows, rows_padded, n_tiles


def _to_tiles(x, rows_padded: int):
    """Flatten -> zero-pad -> (rows_padded, _LANE) f32."""
    flat = jnp.ravel(jnp.asarray(x, jnp.float32))
    pad = rows_padded * _LANE - flat.shape[0]
    if pad:
        flat = jnp.pad(flat, (0, pad))
    return flat.reshape(rows_padded, _LANE)


def _to_tiles_stacked(x, n_ctrl: int, n_elem: int, rows_padded: int):
    """(K, ...) controls -> (K, rows_padded, _LANE) f32 without an extra stack."""
    flat = jnp.asarray(x, jnp.float32).reshape(n_ctrl, n_elem)
    pad = rows_padded * _LANE - n_elem
    if pad:
        flat = jnp.pad(flat, ((0, 0), (0, pad)))
    return flat.reshape(n_ctrl, rows_padded, _LANE)


def _valid_mask(block_rows: int, lane: int, n_elem: int):
    i = pl.program_id(0)
    row = lax.broadcasted_iota(jnp.int32, (block_rows, lane), 0)
    col = lax.broadcasted_iota(jnp.int32, (block_rows, lane), 1)
    flat = (i * block_rows + row) * lane + col
    return flat < n_elem


# --------------------------------------------------------------------------
# Kernels (emit lane-dense per-tile partial sums)
# --------------------------------------------------------------------------
def _cox_cc_multi_kernel(*refs, n_ctrl, shrink, clamp_lo, clamp_hi, n_elem,
                         block_rows, lane, stacked, has_pad):
    """Multi-control Cox case-control loss, one row-tile per grid step.

    stacked=True : refs = (case_ref(BR,L), ctrl_ref(K,BR,L), out_ref(out_rows,L))
    stacked=False: refs = (case_ref, ctrl_ref_0..K-1, out_ref)
    """
    if stacked:
        case_ref, ctrl_ref, out_ref = refs

        def get_ctrl(k):
            return ctrl_ref[k]                       # (BR, L)
    else:
        case_ref = refs[0]
        ctrl_refs = refs[1:1 + n_ctrl]
        out_ref = refs[1 + n_ctrl]

        def get_ctrl(k):
            return ctrl_refs[k][...]                 # (BR, L)

    g_case = case_ref[...]                           # (BR, L)

    control_sum = None
    abs_ctrl = None
    for k in range(n_ctrl):
        ctrl = get_ctrl(k)
        diff = jnp.minimum(ctrl - g_case, clamp_hi)
        if clamp_lo > -1e38:                         # default lower clamp is dead
            diff = jnp.maximum(diff, clamp_lo)
        e = jnp.exp(diff)
        control_sum = e if control_sum is None else control_sum + e
        if shrink != 0.0:
            a = jnp.abs(ctrl)
            abs_ctrl = a if abs_ctrl is None else abs_ctrl + a

    loss = jnp.log(1.0 + control_sum)                # (BR, L)
    if has_pad:
        loss = jnp.where(_valid_mask(block_rows, lane, n_elem), loss, 0.0)

    out_ref[0:1, :] = jnp.sum(loss, axis=0, keepdims=True)
    if shrink != 0.0:
        out_ref[1:2, :] = jnp.sum(jnp.abs(g_case), axis=0, keepdims=True)
        out_ref[2:3, :] = jnp.sum(abs_ctrl, axis=0, keepdims=True)


def _cox_cc_single_kernel(case_ref, ctrl_ref, out_ref, *, shrink, n_elem,
                          block_rows, lane, has_pad):
    """Single-control path: softplus(g_ctrl - g_case), one row-tile per step."""
    g_case = case_ref[...]
    g_ctrl = ctrl_ref[...]

    x = g_ctrl - g_case
    # numerically stable softplus: max(x, 0) + log1p(exp(-|x|))
    sp = jnp.maximum(x, 0.0) + jnp.log1p(jnp.exp(-jnp.abs(x)))
    if has_pad:
        sp = jnp.where(_valid_mask(block_rows, lane, n_elem), sp, 0.0)

    out_ref[0:1, :] = jnp.sum(sp, axis=0, keepdims=True)
    if shrink != 0.0:
        out_ref[1:2, :] = jnp.sum(jnp.abs(g_case), axis=0, keepdims=True)
        out_ref[2:3, :] = jnp.sum(jnp.abs(g_ctrl), axis=0, keepdims=True)


# --------------------------------------------------------------------------
# Wrappers
# --------------------------------------------------------------------------
_COMPILER_PARAMS = pltpu.CompilerParams(
    dimension_semantics=("parallel",),
    vmem_limit_bytes=32 * 1024 * 1024,
)


def cox_cc_loss_pallas(g_case, g_control, shrink=0.0, clamp=(-3e38, 80.0),
                       max_block_rows=_MAX_BLOCK_ROWS):
    """Multi-control Cox case-control loss.

    `g_control` is either a stacked array of shape (K,) + g_case.shape or a
    tuple/list of K arrays with the same shape as `g_case`.
    """
    g_case = jnp.asarray(g_case, jnp.float32)
    stacked = hasattr(g_control, "shape") and not isinstance(g_control, (list, tuple))

    if stacked:
        g_control = jnp.asarray(g_control, jnp.float32)
        n_ctrl = int(g_control.shape[0])
        ctrl0_shape = tuple(g_control.shape[1:])
    else:
        g_control = [jnp.asarray(c, jnp.float32) for c in g_control]
        n_ctrl = len(g_control)
        ctrl0_shape = tuple(g_control[0].shape)

    if tuple(g_case.shape) != ctrl0_shape:
        raise ValueError(
            f"Need `g_case` and `g_control[0]` to have same shape. "
            f"Got {tuple(g_case.shape)} and {ctrl0_shape}")

    shrink = float(shrink)
    clamp_lo, clamp_hi = float(clamp[0]), float(clamp[1])
    n_elem = int(g_case.size)

    block_rows, rows_padded, n_tiles = _tiling(n_elem, n_ctrl + 1, max_block_rows)
    has_pad = rows_padded * _LANE != n_elem
    out_rows = 3 if shrink != 0.0 else 1

    case2d = _to_tiles(g_case, rows_padded)
    case_spec = pl.BlockSpec((block_rows, _LANE), lambda i: (i, 0))

    if stacked:
        ctrl_inputs = (_to_tiles_stacked(g_control, n_ctrl, n_elem, rows_padded),)
        ctrl_specs = [pl.BlockSpec((n_ctrl, block_rows, _LANE), lambda i: (0, i, 0))]
    else:
        ctrl_inputs = tuple(_to_tiles(c, rows_padded) for c in g_control)
        ctrl_specs = [pl.BlockSpec((block_rows, _LANE), lambda i: (i, 0))
                      for _ in range(n_ctrl)]

    kernel = functools.partial(
        _cox_cc_multi_kernel, n_ctrl=n_ctrl, shrink=shrink,
        clamp_lo=clamp_lo, clamp_hi=clamp_hi, n_elem=n_elem,
        block_rows=block_rows, lane=_LANE, stacked=stacked, has_pad=has_pad)

    partials = pl.pallas_call(
        kernel,
        out_shape=jax.ShapeDtypeStruct((out_rows, n_tiles * _LANE), jnp.float32),
        grid=(n_tiles,),
        in_specs=[case_spec] + ctrl_specs,
        out_specs=pl.BlockSpec((out_rows, _LANE), lambda i: (0, i)),
        compiler_params=_COMPILER_PARAMS,
    )(case2d, *ctrl_inputs)

    sums = jnp.sum(partials, axis=1)                 # (out_rows,)
    loss_mean = sums[0] / n_elem
    if shrink == 0.0:
        return loss_mean
    shrink_zero = shrink * (sums[1] / n_elem + sums[2] / n_elem) / n_ctrl
    return loss_mean + jnp.abs(shrink_zero)


def cox_cc_loss_single_ctrl_pallas(g_case, g_control, shrink=0.0,
                                   max_block_rows=_MAX_BLOCK_ROWS):
    g_case = jnp.asarray(g_case, jnp.float32)
    g_control = jnp.asarray(g_control, jnp.float32)
    shrink = float(shrink)
    n_elem = int(g_case.size)

    block_rows, rows_padded, n_tiles = _tiling(n_elem, 2, max_block_rows)
    has_pad = rows_padded * _LANE != n_elem
    out_rows = 3 if shrink != 0.0 else 1

    case2d = _to_tiles(g_case, rows_padded)
    ctrl2d = _to_tiles(g_control, rows_padded)

    kernel = functools.partial(
        _cox_cc_single_kernel, shrink=shrink, n_elem=n_elem,
        block_rows=block_rows, lane=_LANE, has_pad=has_pad)

    partials = pl.pallas_call(
        kernel,
        out_shape=jax.ShapeDtypeStruct((out_rows, n_tiles * _LANE), jnp.float32),
        grid=(n_tiles,),
        in_specs=[pl.BlockSpec((block_rows, _LANE), lambda i: (i, 0)),
                  pl.BlockSpec((block_rows, _LANE), lambda i: (i, 0))],
        out_specs=pl.BlockSpec((out_rows, _LANE), lambda i: (0, i)),
        compiler_params=_COMPILER_PARAMS,
    )(case2d, ctrl2d)

    sums = jnp.sum(partials, axis=1)
    loss = sums[0] / n_elem
    if shrink != 0.0:
        loss = loss + shrink * (sums[1] / n_elem + sums[2] / n_elem)
    return loss


class CoxCCLoss:
    """JAX/Pallas port of the PyTorch CoxCCLoss module (no learnable params)."""

    def __init__(self, shrink: float = 0.0, clamp=(-3e38, 80.0)):
        if shrink < 0:
            raise ValueError(f"Need shrink to be non-negative, got {shrink}.")
        self.shrink = float(shrink)
        self.clamp = (float(clamp[0]), float(clamp[1]))

    def __call__(self, g_case, g_control):
        # Dispatch mirrors the PyTorch forward().
        if hasattr(g_control, "shape") and not isinstance(g_control, (list, tuple)):
            g_control = jnp.asarray(g_control)
            if tuple(g_case.shape) == tuple(g_control.shape):
                return cox_cc_loss_single_ctrl_pallas(g_case, g_control, self.shrink)
            return cox_cc_loss_pallas(g_case, g_control, self.shrink, self.clamp)
        if (len(g_control) == 1
                and tuple(g_control[0].shape) == tuple(g_case.shape)):
            return cox_cc_loss_single_ctrl_pallas(g_case, g_control[0], self.shrink)
        return cox_cc_loss_pallas(g_case, tuple(g_control), self.shrink, self.clamp)


# --------------------------------------------------------------------------
# Pure-JAX references (validation only)
# --------------------------------------------------------------------------
def _ref_multi(g_case, g_ctrls, shrink, clamp):
    control_sum = 0.0
    shrink_control = 0.0
    for ctr in g_ctrls:
        shrink_control = shrink_control + jnp.abs(ctr).mean()
        d = jnp.clip(ctr - g_case, clamp[0], clamp[1])
        control_sum = control_sum + jnp.exp(d)
    loss = jnp.log(1.0 + control_sum)
    shrink_zero = shrink * (jnp.abs(g_case).mean() + shrink_control) / len(g_ctrls)
    return loss.mean() + jnp.abs(shrink_zero)


def _ref_single(g_case, g_ctrl, shrink):
    loss = jax.nn.softplus(g_ctrl - g_case).mean()
    if shrink != 0:
        loss = loss + shrink * (jnp.abs(g_case).mean() + jnp.abs(g_ctrl).mean())
    return loss


# --------------------------------------------------------------------------
if __name__ == "__main__":
    key = jax.random.PRNGKey(0)
    k1, k2, k3, k4, k5 = jax.random.split(key, 5)

    N, K = 128, 4
    g_case = jax.random.normal(k1, (N, 1), dtype=jnp.float32)
    g_ctrl_stacked = jax.random.normal(k2, (K, N, 1), dtype=jnp.float32)
    g_control_tuple = tuple(g_ctrl_stacked)          # K separate (N, 1) controls
    g_control_single = jax.random.normal(k3, (N, 1), dtype=jnp.float32)

    loss_shrink = CoxCCLoss(shrink=0.1)
    loss_plain = CoxCCLoss(shrink=0.0)

    out_multi = loss_shrink(g_case, g_control_tuple)       # tuple controls
    out_multi_plain = loss_plain(g_case, g_control_tuple)  # shrink == 0 path
    out_multi_stacked = loss_shrink(g_case, g_ctrl_stacked)  # pre-stacked controls
    out_single = loss_shrink(g_case, g_control_single)     # single-control path

    # Exercise the multi-tile (grid > 1) pipelined path with small row blocks.
    N2, K2 = 9000, 2
    g_case2 = jax.random.normal(k4, (N2, 1), dtype=jnp.float32)
    g_ctrl2 = jax.random.normal(k5, (K2, N2, 1), dtype=jnp.float32)
    out_tiled = cox_cc_loss_pallas(g_case2, g_ctrl2, shrink=0.05,
                                   max_block_rows=8)

    jax.block_until_ready((out_multi, out_multi_plain, out_multi_stacked,
                           out_single, out_tiled))

    ref_multi = _ref_multi(g_case, g_control_tuple, 0.1, (-3e38, 80.0))
    ref_multi_plain = _ref_multi(g_case, g_control_tuple, 0.0, (-3e38, 80.0))
    ref_single = _ref_single(g_case, g_control_single, 0.1)
    ref_tiled = _ref_multi(g_case2, list(g_ctrl2), 0.05, (-3e38, 80.0))

    def _check(a, b):
        assert jnp.allclose(a, b, rtol=1e-4, atol=1e-5), (a, b)

    _check(out_multi, ref_multi)
    _check(out_multi_plain, ref_multi_plain)
    _check(out_multi_stacked, ref_multi)
    _check(out_single, ref_single)
    _check(out_tiled, ref_tiled)

    print("KERNEL_OK")
</pallas_src>

<mosaic_0001>
module attributes {stable_mosaic.version = 11 : i64} {
  func.func @_cox_cc_multi_kernel(%arg0: i32, %arg1: memref<8x512xf32, #tpu.memory_space<vmem>>, %arg2: memref<8x512xf32, #tpu.memory_space<vmem>>, %arg3: memref<8x512xf32, #tpu.memory_space<vmem>>, %arg4: memref<8x512xf32, #tpu.memory_space<vmem>>, %arg5: memref<8x512xf32, #tpu.memory_space<vmem>>, %arg6: memref<3x512xf32, #tpu.memory_space<vmem>>) attributes {dimension_semantics = [#tpu.dimension_semantics<parallel>], iteration_bounds = array<i64: 1>, scalar_prefetch = 0 : i64, scratch_operands = 0 : i64, tpu.core_type = #tpu.core_type<tc>, window_params = [{transform_indices = @transform_0, window_bounds = array<i64: 8, 512>}, {transform_indices = @transform_1, window_bounds = array<i64: 8, 512>}, {transform_indices = @transform_2, window_bounds = array<i64: 8, 512>}, {transform_indices = @transform_3, window_bounds = array<i64: 8, 512>}, {transform_indices = @transform_4, window_bounds = array<i64: 8, 512>}, {transform_indices = @transform_5, window_bounds = array<i64: 3, 512>}]} {
    %c0 = arith.constant 0 : index
    %c0_0 = arith.constant 0 : index
    %0 = vector.load %arg1[%c0, %c0_0] : memref<8x512xf32, #tpu.memory_space<vmem>>, vector<8x512xf32>
    %c0_1 = arith.constant 0 : index
    %c0_2 = arith.constant 0 : index
    %1 = vector.load %arg2[%c0_1, %c0_2] : memref<8x512xf32, #tpu.memory_space<vmem>>, vector<8x512xf32>
    %2 = arith.subf %1, %0 : vector<8x512xf32>
    %cst = arith.constant 8.000000e+01 : f32
    %3 = vector.broadcast %cst : f32 to vector<8x512xf32>
    %4 = arith.minimumf %2, %3 : vector<8x512xf32>
    %5 = math.exp %4 : vector<8x512xf32>
    %6 = math.absf %1 : vector<8x512xf32>
    %c0_3 = arith.constant 0 : index
    %c0_4 = arith.constant 0 : index
    %7 = vector.load %arg3[%c0_3, %c0_4] : memref<8x512xf32, #tpu.memory_space<vmem>>, vector<8x512xf32>
    %8 = arith.subf %7, %0 : vector<8x512xf32>
    %cst_5 = arith.constant 8.000000e+01 : f32
    %9 = vector.broadcast %cst_5 : f32 to vector<8x512xf32>
    %10 = arith.minimumf %8, %9 : vector<8x512xf32>
    %11 = math.exp %10 : vector<8x512xf32>
    %12 = arith.addf %5, %11 : vector<8x512xf32>
    %13 = math.absf %7 : vector<8x512xf32>
    %14 = arith.addf %6, %13 : vector<8x512xf32>
    %c0_6 = arith.constant 0 : index
    %c0_7 = arith.constant 0 : index
    %15 = vector.load %arg4[%c0_6, %c0_7] : memref<8x512xf32, #tpu.memory_space<vmem>>, vector<8x512xf32>
    %16 = arith.subf %15, %0 : vector<8x512xf32>
    %cst_8 = arith.constant 8.000000e+01 : f32
    %17 = vector.broadcast %cst_8 : f32 to vector<8x512xf32>
    %18 = arith.minimumf %16, %17 : vector<8x512xf32>
    %19 = math.exp %18 : vector<8x512xf32>
    %20 = arith.addf %12, %19 : vector<8x512xf32>
    %21 = math.absf %15 : vector<8x512xf32>
    %22 = arith.addf %14, %21 : vector<8x512xf32>
    %c0_9 = arith.constant 0 : index
    %c0_10 = arith.constant 0 : index
    %23 = vector.load %arg5[%c0_9, %c0_10] : memref<8x512xf32, #tpu.memory_space<vmem>>, vector<8x512xf32>
    %24 = arith.subf %23, %0 : vector<8x512xf32>
    %cst_11 = arith.constant 8.000000e+01 : f32
    %25 = vector.broadcast %cst_11 : f32 to vector<8x512xf32>
    %26 = arith.minimumf %24, %25 : vector<8x512xf32>
    %27 = math.exp %26 : vector<8x512xf32>
    %28 = arith.addf %20, %27 : vector<8x512xf32>
    %29 = math.absf %23 : vector<8x512xf32>
    %30 = arith.addf %22, %29 : vector<8x512xf32>
    %cst_12 = arith.constant 1.000000e+00 : f32
    %31 = vector.broadcast %cst_12 : f32 to vector<8x512xf32>
    %32 = arith.addf %31, %28 : vector<8x512xf32>
    %33 = math.log %32 : vector<8x512xf32>
    %34 = tpu.iota {dimensions = array<i32: 0>} : vector<8x512xi32>
    %35 = tpu.iota {dimensions = array<i32: 1>} : vector<8x512xi32>
    %c8_i32 = arith.constant 8 : i32
    %36 = arith.muli %arg0, %c8_i32 : i32
    %37 = vector.broadcast %36 : i32 to vector<8x512xi32>
    %38 = arith.addi %37, %34 : vector<8x512xi32>
    %c512_i32 = arith.constant 512 : i32
    %39 = vector.broadcast %c512_i32 : i32 to vector<8x512xi32>
    %40 = arith.muli %38, %39 : vector<8x512xi32>
    %41 = arith.addi %40, %35 : vector<8x512xi32>
    %c128_i32 = arith.constant 128 : i32
    %42 = vector.broadcast %c128_i32 : i32 to vector<8x512xi32>
    %43 = arith.cmpi slt, %41, %42 : vector<8x512xi32>
    %cst_13 = arith.constant 0.000000e+00 : f32
    %44 = vector.broadcast %cst_13 : f32 to vector<8x512xf32>
    %45 = arith.select %43, %33, %44 : vector<8x512xi1>, vector<8x512xf32>
    %cst_14 = arith.constant dense<0.000000e+00> : vector<512xf32>
    %46 = vector.multi_reduction <add>, %45, %cst_14 [0] : vector<8x512xf32> to vector<512xf32>
    %47 = vector.shape_cast %46 : vector<512xf32> to vector<1x512xf32>
    %c0_15 = arith.constant 0 : index
    %c0_16 = arith.constant 0 : index
    %48 = vector.load %arg6[%c0_15, %c0_16] : memref<3x512xf32, #tpu.memory_space<vmem>>, vector<1x512xf32>
    tpu.vector_store %arg6[%c0_15, %c0_16], %47 {strides = array<i32>} : memref<3x512xf32, #tpu.memory_space<vmem>>, vector<1x512xf32>,
    %49 = math.absf %0 : vector<8x512xf32>
    %cst_17 = arith.constant dense<0.000000e+00> : vector<512xf32>
    %50 = vector.multi_reduction <add>, %49, %cst_17 [0] : vector<8x512xf32> to vector<512xf32>
    %51 = vector.shape_cast %50 : vector<512xf32> to vector<1x512xf32>
    %c1 = arith.constant 1 : index
    %c0_18 = arith.constant 0 : index
    %52 = vector.load %arg6[%c1, %c0_18] : memref<3x512xf32, #tpu.memory_space<vmem>>, vector<1x512xf32>
    tpu.vector_store %arg6[%c1, %c0_18], %51 {strides = array<i32>} : memref<3x512xf32, #tpu.memory_space<vmem>>, vector<1x512xf32>,
    %cst_19 = arith.constant dense<0.000000e+00> : vector<512xf32>
    %53 = vector.multi_reduction <add>, %30, %cst_19 [0] : vector<8x512xf32> to vector<512xf32>
    %54 = vector.shape_cast %53 : vector<512xf32> to vector<1x512xf32>
    %c2 = arith.constant 2 : index
    %c0_20 = arith.constant 0 : index
    %55 = vector.load %arg6[%c2, %c0_20] : memref<3x512xf32, #tpu.memory_space<vmem>>, vector<1x512xf32>
    tpu.vector_store %arg6[%c2, %c0_20], %54 {strides = array<i32>} : memref<3x512xf32, #tpu.memory_space<vmem>>, vector<1x512xf32>,
    return
  }
  func.func @transform_0(%arg0: i32) -> (i32, i32) {
    %c0_i32 = arith.constant 0 : i32
    %c0_i32_0 = arith.constant 0 : i32
    return %arg0, %c0_i32 : i32, i32
  }
  func.func @transform_1(%arg0: i32) -> (i32, i32) {
    %c0_i32 = arith.constant 0 : i32
    %c0_i32_0 = arith.constant 0 : i32
    return %arg0, %c0_i32 : i32, i32
  }
  func.func @transform_2(%arg0: i32) -> (i32, i32) {
    %c0_i32 = arith.constant 0 : i32
    %c0_i32_0 = arith.constant 0 : i32
    return %arg0, %c0_i32 : i32, i32
  }
  func.func @transform_3(%arg0: i32) -> (i32, i32) {
    %c0_i32 = arith.constant 0 : i32
    %c0_i32_0 = arith.constant 0 : i32
    return %arg0, %c0_i32 : i32, i32
  }
  func.func @transform_4(%arg0: i32) -> (i32, i32) {
    %c0_i32 = arith.constant 0 : i32
    %c0_i32_0 = arith.constant 0 : i32
    return %arg0, %c0_i32 : i32, i32
  }
  func.func @transform_5(%arg0: i32) -> (i32, i32) {
    %c0_i32 = arith.constant 0 : i32
    %c0_i32_0 = arith.constant 0 : i32
    return %c0_i32, %arg0 : i32, i32
  }
}

</mosaic_0001>

<llo_original>
// kernel: tpu_custom_call.1
$region0: #{tpu_custom_call.1}
  #allocation0 [shape = 'u32[]', space=smem, size = 0x4, offset = 0x4, fixed_abs, tag = 'smem constant byte address 0x4 - core index']
  #allocation1 [shape = 'u32[144,128]{1,0:T(1,128)}', space=vmem, size = 0x12000, scoped, tag = 'internal scratch']
  %s0 = inlined_call_operand.hbm [shape: f32[8,512], index: 0, kind: input, shape index: {}]
  %s1 = inlined_call_operand.hbm [shape: f32[8,512], index: 1, kind: input, shape index: {}]
  %s2 = inlined_call_operand.hbm [shape: f32[8,512], index: 2, kind: input, shape index: {}]
  %s3 = inlined_call_operand.hbm [shape: f32[8,512], index: 3, kind: input, shape index: {}]
  %s4 = inlined_call_operand.hbm [shape: f32[8,512], index: 4, kind: input, shape index: {}]
  %s5 = inlined_call_operand.hbm [shape: f32[3,512], index: 5, kind: output, shape index: {}]
  %s6 = sld [smem:[#allocation0]]
  $region50: #{tpu_custom_call.1} parent=0
    _
  %s8 = ssub.s32 1, %s6
  %s9 = scalar_select 0, %s8, %s6
  $region1: #{tpu_custom_call.1} parent=0
    #allocation2 [shape = 'u8[16384]{0}', space=vmem, size = 0x4000, scoped, tag = 'input window, operand 0, single buffered']
    #allocation3 [shape = 's32[1]{0}', space=sflag, size = 0x4, scoped, tag = 'scoped memory for tpu_custom_call.1']
    #allocation4 [shape = 's32[1]{0}', space=sflag, size = 0x4, scoped, tag = 'scoped memory for tpu_custom_call.1']
    #allocation5 [shape = 'u8[16384]{0}', space=vmem, size = 0x4000, scoped, tag = 'input window, operand 1, single buffered']
    #allocation6 [shape = 's32[1]{0}', space=sflag, size = 0x4, scoped, tag = 'scoped memory for tpu_custom_call.1']
    #allocation7 [shape = 'u8[16384]{0}', space=vmem, size = 0x4000, scoped, tag = 'input window, operand 2, single buffered']
    #allocation8 [shape = 'u8[16384]{0}', space=vmem, size = 0x4000, scoped, tag = 'input window, operand 3, single buffered']
    #allocation9 [shape = 's32[1]{0}', space=sflag, size = 0x4, scoped, tag = 'scoped memory for tpu_custom_call.1']
    #allocation10 [shape = 'u8[16384]{0}', space=vmem, size = 0x4000, scoped, tag = 'input window, operand 4, single buffered']
    #allocation11 [shape = 'u8[8192]{0}', space=vmem, size = 0x2000, scoped, tag = 'output window, operand 0, single buffered']
    %10 = vsyncpa [#allocation3], 0
    %11 = vsyncpa [#allocation6], 0
    %12 = vsyncpa [#allocation9], 0
    %13 = vsyncpa [#allocation4], 0
    // Predicated region
    $region2: #{tpu_custom_call.1} parent=1 // pred_check
      _
    $region3: #{tpu_custom_call.1} parent=1 // pred_check_branch
      %15 = sbr.rel (0) target = $region5
    $region4: #{tpu_custom_call.1} parent=1 // pred_region
      %s17 = ssub.s32 512, 512
      %18 = vsyncadd [#allocation3], %s17
      %s20 = sshll.u32 [#allocation2], 4
      %s21 = int_to_ptr.vmem [resolvable:$true] %s20
      %23 = dma.hbm_to_vmem [thread:$0]  %s0, 512, %s21, [#allocation3]
    $region5: #{tpu_custom_call.1} parent=1 // pred_fallthru
      _
    // Predicated region
    $region6: #{tpu_custom_call.1} parent=1 // pred_check
      _
    $region7: #{tpu_custom_call.1} parent=1 // pred_check_branch
      %25 = sbr.rel (0) target = $region9
    $region8: #{tpu_custom_call.1} parent=1 // pred_region
      %s27 = ssub.s32 512, 512
      %28 = vsyncadd [#allocation6], %s27
      %s30 = sshll.u32 [#allocation5], 4
      %s31 = int_to_ptr.vmem [resolvable:$true] %s30
      %33 = dma.hbm_to_vmem [thread:$0]  %s1, 512, %s31, [#allocation6]
    $region9: #{tpu_custom_call.1} parent=1 // pred_fallthru
      _
    // Predicated region
    $region10: #{tpu_custom_call.1} parent=1 // pred_check
      _
    $region11: #{tpu_custom_call.1} parent=1 // pred_check_branch
      %35 = sbr.rel (0) target = $region13
    $region12: #{tpu_custom_call.1} parent=1 // pred_region
      %s37 = ssub.s32 512, 512
      %38 = vsyncadd [#allocation6], %s37
      %s40 = sshll.u32 [#allocation7], 4
      %s41 = int_to_ptr.vmem [resolvable:$true] %s40
      %43 = dma.hbm_to_vmem [thread:$0]  %s2, 512, %s41, [#allocation6]
    $region13: #{tpu_custom_call.1} parent=1 // pred_fallthru
      _
    // Predicated region
    $region14: #{tpu_custom_call.1} parent=1 // pred_check
      _
    $region15: #{tpu_custom_call.1} parent=1 // pred_check_branch
      %45 = sbr.rel (0) target = $region17
    $region16: #{tpu_custom_call.1} parent=1 // pred_region
      %s47 = ssub.s32 512, 512
      %48 = vsyncadd [#allocation9], %s47
      %s50 = sshll.u32 [#allocation8], 4
      %s51 = int_to_ptr.vmem [resolvable:$true] %s50
      %53 = dma.hbm_to_vmem [thread:$0]  %s3, 512, %s51, [#allocation9]
    $region17: #{tpu_custom_call.1} parent=1 // pred_fallthru
      _
    // Predicated region
    $region18: #{tpu_custom_call.1} parent=1 // pred_check
      _
    $region19: #{tpu_custom_call.1} parent=1 // pred_check_branch
      %55 = sbr.rel (0) target = $region21
    $region20: #{tpu_custom_call.1} parent=1 // pred_region
      %s57 = ssub.s32 512, 512
      %58 = vsyncadd [#allocation9], %s57
      %s60 = sshll.u32 [#allocation10], 4
      %s61 = int_to_ptr.vmem [resolvable:$true] %s60
      %63 = dma.hbm_to_vmem [thread:$0]  %s4, 512, %s61, [#allocation9]
    $region21: #{tpu_custom_call.1} parent=1 // pred_fallthru
      _
    // Predicated region
    $region22: #{tpu_custom_call.1} parent=1 // pred_check
      _
    $region23: #{tpu_custom_call.1} parent=1 // pred_check_branch
      %65 = sbr.rel (0) target = $region25
    $region24: #{tpu_custom_call.1} parent=1 // pred_region
      %66 = dma.done [#allocation3], 512
    $region25: #{tpu_custom_call.1} parent=1 // pred_fallthru
      _
    // Predicated region
    $region26: #{tpu_custom_call.1} parent=1 // pred_check
      _
    $region27: #{tpu_custom_call.1} parent=1 // pred_check_branch
      %68 = sbr.rel (0) target = $region29
    $region28: #{tpu_custom_call.1} parent=1 // pred_region
      %69 = dma.done [#allocation6], 512
    $region29: #{tpu_custom_call.1} parent=1 // pred_fallthru
      _
    // Predicated region
    $region30: #{tpu_custom_call.1} parent=1 // pred_check
      _
    $region31: #{tpu_custom_call.1} parent=1 // pred_check_branch
      %71 = sbr.rel (0) target = $region33
    $region32: #{tpu_custom_call.1} parent=1 // pred_region
      %72 = dma.done [#allocation6], 512
    $region33: #{tpu_custom_call.1} parent=1 // pred_fallthru
      _
    // Predicated region
    $region34: #{tpu_custom_call.1} parent=1 // pred_check
      _
    $region35: #{tpu_custom_call.1} parent=1 // pred_check_branch
      %74 = sbr.rel (0) target = $region37
    $region36: #{tpu_custom_call.1} parent=1 // pred_region
      %75 = dma.done [#allocation9], 512
    $region37: #{tpu_custom_call.1} parent=1 // pred_fallthru
      _
    // Predicated region
    $region38: #{tpu_custom_call.1} parent=1 // pred_check
      _
    $region39: #{tpu_custom_call.1} parent=1 // pred_check_branch
      %77 = sbr.rel (0) target = $region41
    $region40: #{tpu_custom_call.1} parent=1 // pred_region
      %78 = dma.done [#allocation9], 512
    $region41: #{tpu_custom_call.1} parent=1 // pred_fallthru
      _
    %v79 = vld [vmem:[#allocation2] sm:$0xff]
    %v80 = vld [vmem:[#allocation2 + $0x8] sm:$0xff]
    %v81 = vld [vmem:[#allocation2 + $0x10] sm:$0xff]
    %v82 = vld [vmem:[#allocation2 + $0x18] sm:$0xff]
    %v83 = vld [vmem:[#allocation5] sm:$0xff]
    %v84 = vld [vmem:[#allocation5 + $0x8] sm:$0xff]
    %v85 = vld [vmem:[#allocation5 + $0x10] sm:$0xff]
    %v86 = vld [vmem:[#allocation5 + $0x18] sm:$0xff]
    %v87 = vsub.f32 %v83, %v79
    %v88 = vsub.f32 %v84, %v80
    %v89 = vsub.f32 %v85, %v81
    %v90 = vsub.f32 %v86, %v82
    %v91 = vmin.f32 %v87, 80.0
    %v92 = vmin.f32 %v88, 80.0
    %v93 = vmin.f32 %v89, 80.0
    %v94 = vmin.f32 %v90, 80.0
    %v95 = vmul.f32 %v91, 1.442695
    %v96 = vpow.pop %v95
    %v97 = vmul.f32 %v92, 1.442695
    %v98 = vpow.pop %v97
    %v99 = vmul.f32 %v93, 1.442695
    %v100 = vpow.pop %v99
    %v101 = vmul.f32 %v94, 1.442695
    %v102 = vpow.pop %v101
    %v103 = vand.u32 2147483647, %v83
    %v104 = vand.u32 2147483647, %v84
    %v105 = vand.u32 2147483647, %v85
    %v106 = vand.u32 2147483647, %v86
    %v107 = vld [vmem:[#allocation7] sm:$0xff]
    %v108 = vld [vmem:[#allocation7 + $0x8] sm:$0xff]
    %v109 = vld [vmem:[#allocation7 + $0x10] sm:$0xff]
    %v110 = vld [vmem:[#allocation7 + $0x18] sm:$0xff]
    %v111 = vsub.f32 %v107, %v79
    %v112 = vsub.f32 %v108, %v80
    %v113 = vsub.f32 %v109, %v81
    %v114 = vsub.f32 %v110, %v82
    %v115 = vmin.f32 %v111, 80.0
    %v116 = vmin.f32 %v112, 80.0
    %v117 = vmin.f32 %v113, 80.0
    %v118 = vmin.f32 %v114, 80.0
    %v119 = vmul.f32 %v115, 1.442695
    %v120 = vpow.pop %v119
    %v121 = vmul.f32 %v116, 1.442695
    %v122 = vpow.pop %v121
    %v123 = vmul.f32 %v117, 1.442695
    %v124 = vpow.pop %v123
    %v125 = vmul.f32 %v118, 1.442695
    %v126 = vpow.pop %v125
    %v127 = vadd.f32 %v96, %v120
    %v128 = vadd.f32 %v98, %v122
    %v129 = vadd.f32 %v100, %v124
    %v130 = vadd.f32 %v102, %v126
    %v131 = vand.u32 2147483647, %v107
    %v132 = vand.u32 2147483647, %v108
    %v133 = vand.u32 2147483647, %v109
    %v134 = vand.u32 2147483647, %v110
    %v135 = vadd.f32 %v103, %v131
    %v136 = vadd.f32 %v104, %v132
    %v137 = vadd.f32 %v105, %v133
    %v138 = vadd.f32 %v106, %v134
    %v139 = vld [vmem:[#allocation8] sm:$0xff]
    %v140 = vld [vmem:[#allocation8 + $0x8] sm:$0xff]
    %v141 = vld [vmem:[#allocation8 + $0x10] sm:$0xff]
    %v142 = vld [vmem:[#allocation8 + $0x18] sm:$0xff]
    %v143 = vsub.f32 %v139, %v79
    %v144 = vsub.f32 %v140, %v80
    %v145 = vsub.f32 %v141, %v81
    %v146 = vsub.f32 %v142, %v82
    %v147 = vmin.f32 %v143, 80.0
    %v148 = vmin.f32 %v144, 80.0
    %v149 = vmin.f32 %v145, 80.0
    %v150 = vmin.f32 %v146, 80.0
    %v151 = vmul.f32 %v147, 1.442695
    %v152 = vpow.pop %v151
    %v153 = vmul.f32 %v148, 1.442695
    %v154 = vpow.pop %v153
    %v155 = vmul.f32 %v149, 1.442695
    %v156 = vpow.pop %v155
    %v157 = vmul.f32 %v150, 1.442695
    %v158 = vpow.pop %v157
    %v159 = vadd.f32 %v127, %v152
    %v160 = vadd.f32 %v128, %v154
    %v161 = vadd.f32 %v129, %v156
    %v162 = vadd.f32 %v130, %v158
    %v163 = vand.u32 2147483647, %v139
    %v164 = vand.u32 2147483647, %v140
    %v165 = vand.u32 2147483647, %v141
    %v166 = vand.u32 2147483647, %v142
    %v167 = vadd.f32 %v135, %v163
    %v168 = vadd.f32 %v136, %v164
    %v169 = vadd.f32 %v137, %v165
    %v170 = vadd.f32 %v138, %v166
    %v171 = vld [vmem:[#allocation10] sm:$0xff]
    %v172 = vld [vmem:[#allocation10 + $0x8] sm:$0xff]
    %v173 = vld [vmem:[#allocation10 + $0x10] sm:$0xff]
    %v174 = vld [vmem:[#allocation10 + $0x18] sm:$0xff]
    %v175 = vsub.f32 %v171, %v79
    %v176 = vsub.f32 %v172, %v80
    %v177 = vsub.f32 %v173, %v81
    %v178 = vsub.f32 %v174, %v82
    %v179 = vmin.f32 %v175, 80.0
    %v180 = vmin.f32 %v176, 80.0
    %v181 = vmin.f32 %v177, 80.0
    %v182 = vmin.f32 %v178, 80.0
    %v183 = vmul.f32 %v179, 1.442695
    %v184 = vpow.pop %v183
    %v185 = vmul.f32 %v180, 1.442695
    %v186 = vpow.pop %v185
    %v187 = vmul.f32 %v181, 1.442695
    %v188 = vpow.pop %v187
    %v189 = vmul.f32 %v182, 1.442695
    %v190 = vpow.pop %v189
    %v191 = vadd.f32 %v159, %v184
    %v192 = vadd.f32 %v160, %v186
    %v193 = vadd.f32 %v161, %v188
    %v194 = vadd.f32 %v162, %v190
    %v195 = vand.u32 2147483647, %v171
    %v196 = vand.u32 2147483647, %v172
    %v197 = vand.u32 2147483647, %v173
    %v198 = vand.u32 2147483647, %v174
    %v199 = vadd.f32 %v167, %v195
    %v200 = vadd.f32 %v168, %v196
    %v201 = vadd.f32 %v169, %v197
    %v202 = vadd.f32 %v170, %v198
    %v203 = vadd.f32 %v191, 1.0
    %v204 = vadd.f32 %v192, 1.0
    %v205 = vadd.f32 %v193, 1.0
    %v206 = vadd.f32 %v194, 1.0
    %v207 = vlog2.pop %v203
    %v208 = vmul.f32 %v207, 0.6931472
    %v209 = vlog2.pop %v204
    %v210 = vmul.f32 %v209, 0.6931472
    %v211 = vlog2.pop %v205
    %v212 = vmul.f32 %v211, 0.6931472
    %v213 = vlog2.pop %v206
    %v214 = vmul.f32 %v213, 0.6931472
    %v215 = vlaneseq
    %v216 = vshrl.u32 %v215, 7
    %v217 = vlaneseq
    %v218 = vand.u32 %v217, 127
    %v219 = vadd.s32 %v218, 128
    %v220 = vadd.s32 %v218, 256
    %v221 = vadd.s32 %v218, 384
    %s222 = smul.u32 0, 8
    %v223 = vstv %s222
    %v224 = vadd.s32 %v223, %v216
    %v225 = vmul.u32 %v224, 512
    %v226 = vadd.s32 %v225, %v218
    %v227 = vadd.s32 %v225, %v219
    %v228 = vadd.s32 %v225, %v220
    %v229 = vadd.s32 %v225, %v221
    %vm230 = vcmp.lt.s32.totalorder %v226, 128
    %vm231 = vcmp.lt.s32.totalorder %v227, 128
    %vm232 = vcmp.lt.s32.totalorder %v228, 128
    %vm233 = vcmp.lt.s32.totalorder %v229, 128
    %v234 = vsel %vm230, %v208, 0.0
    %v235 = vsel %vm231, %v210, 0.0
    %v236 = vsel %vm232, %v212, 0.0
    %v237 = vsel %vm233, %v214, 0.0
    %v238 = vrot.slane %v234, 4
    %v239 = vadd.f32 %v234, %v238
    %v240 = vrot.slane %v239, 2
    %v241 = vadd.f32 %v239, %v240
    %v242 = vrot.slane %v241, 1
    %v243 = vadd.f32 %v241, %v242
    %v244 = vrot.slane %v235, 4
    %v245 = vadd.f32 %v235, %v244
    %v246 = vrot.slane %v245, 2
    %v247 = vadd.f32 %v245, %v246
    %v248 = vrot.slane %v247, 1
    %v249 = vadd.f32 %v247, %v248
    %v250 = vrot.slane %v236, 4
    %v251 = vadd.f32 %v236, %v250
    %v252 = vrot.slane %v251, 2
    %v253 = vadd.f32 %v251, %v252
    %v254 = vrot.slane %v253, 1
    %v255 = vadd.f32 %v253, %v254
    %v256 = vrot.slane %v237, 4
    %v257 = vadd.f32 %v237, %v256
    %v258 = vrot.slane %v257, 2
    %v259 = vadd.f32 %v257, %v258
    %v260 = vrot.slane %v259, 1
    %v261 = vadd.f32 %v259, %v260
    %v266 = vcombine.low %v243, %v249
    %v267 = vcombine.low %v255, %v261
    %v269 = vunpack.c.l.s4 1966171168
    %v270 = vunpack.c.0.s8 %v269
    %v271 = vlaneseq
    %v272 = vshrl.u32 %v271, 7
    %v273 = vsub.s32 %v270, %v272
    %v274 = vrot.slane %v266, %v273
    %v276 = vunpack.c.l.s4 1966171168
    %v277 = vunpack.c.0.s8 %v276
    %v278 = vlaneseq
    %v279 = vshrl.u32 %v278, 7
    %v280 = vsub.s32 %v277, %v279
    %v281 = vrot.slane %v267, %v280
    %v282 = vcombine.low %v274, %v281
    %v284 = vunpack.c.l.s4 1966171168
    %v285 = vunpack.c.0.s8 %v284
    %v286 = vlaneseq
    %v287 = vshrl.u32 %v286, 7
    %v288 = vsub.s32 %v285, %v287
    %v289 = vrot.slane %v282, %v288
    %v291 = vlaneseq
    %vm292 = vcmp.ge.s32.totalorder %v291, 0
    %vm293 = vcmp.lt.s32.totalorder %v291, 512
    %vm294 = vmand %vm292, %vm293
    %295 = vst.msk [vmem:[#allocation11] ss:$4 sm:$0xf] %vm294, %v289
    %v296 = vand.u32 2147483647, %v79
    %v297 = vand.u32 2147483647, %v80
    %v298 = vand.u32 2147483647, %v81
    %v299 = vand.u32 2147483647, %v82
    %v300 = vrot.slane %v296, 4
    %v301 = vadd.f32 %v296, %v300
    %v302 = vrot.slane %v301, 2
    %v303 = vadd.f32 %v301, %v302
    %v304 = vrot.slane %v303, 1
    %v305 = vadd.f32 %v303, %v304
    %v306 = vrot.slane %v297, 4
    %v307 = vadd.f32 %v297, %v306
    %v308 = vrot.slane %v307, 2
    %v309 = vadd.f32 %v307, %v308
    %v310 = vrot.slane %v309, 1
    %v311 = vadd.f32 %v309, %v310
    %v312 = vrot.slane %v298, 4
    %v313 = vadd.f32 %v298, %v312
    %v314 = vrot.slane %v313, 2
    %v315 = vadd.f32 %v313, %v314
    %v316 = vrot.slane %v315, 1
    %v317 = vadd.f32 %v315, %v316
    %v318 = vrot.slane %v299, 4
    %v319 = vadd.f32 %v299, %v318
    %v320 = vrot.slane %v319, 2
    %v321 = vadd.f32 %v319, %v320
    %v322 = vrot.slane %v321, 1
    %v323 = vadd.f32 %v321, %v322
    %v328 = vcombine.low %v305, %v311
    %v329 = vcombine.low %v317, %v323
    %v331 = vunpack.c.l.s4 1966171168
    %v332 = vunpack.c.0.s8 %v331
    %v333 = vlaneseq
    %v334 = vshrl.u32 %v333, 7
    %v335 = vsub.s32 %v332, %v334
    %v336 = vrot.slane %v328, %v335
    %v338 = vunpack.c.l.s4 1966171168
    %v339 = vunpack.c.0.s8 %v338
    %v340 = vlaneseq
    %v341 = vshrl.u32 %v340, 7
    %v342 = vsub.s32 %v339, %v341
    %v343 = vrot.slane %v329, %v342
    %v344 = vcombine.low %v336, %v343
    %v346 = vunpack.c.l.s4 1966171168
    %v347 = vunpack.c.0.s8 %v346
    %v348 = vlaneseq
    %v349 = vshrl.u32 %v348, 7
    %v350 = vsub.s32 %v347, %v349
    %v351 = vrot.slane %v344, %v350
    %s353 = scalar_lea.vmem [#allocation11], 1
    %354 = vst.msk [vmem:[%s353] ss:$4 sm:$0xf] %vm294, %v351
    %v355 = vrot.slane %v199, 4
    %v356 = vadd.f32 %v199, %v355
    %v357 = vrot.slane %v356, 2
    %v358 = vadd.f32 %v356, %v357
    %v359 = vrot.slane %v358, 1
    %v360 = vadd.f32 %v358, %v359
    %v361 = vrot.slane %v200, 4
    %v362 = vadd.f32 %v200, %v361
    %v363 = vrot.slane %v362, 2
    %v364 = vadd.f32 %v362, %v363
    %v365 = vrot.slane %v364, 1
    %v366 = vadd.f32 %v364, %v365
    %v367 = vrot.slane %v201, 4
    %v368 = vadd.f32 %v201, %v367
    %v369 = vrot.slane %v368, 2
    %v370 = vadd.f32 %v368, %v369
    %v371 = vrot.slane %v370, 1
    %v372 = vadd.f32 %v370, %v371
    %v373 = vrot.slane %v202, 4
    %v374 = vadd.f32 %v202, %v373
    %v375 = vrot.slane %v374, 2
    %v376 = vadd.f32 %v374, %v375
    %v377 = vrot.slane %v376, 1
    %v378 = vadd.f32 %v376, %v377
    %v383 = vcombine.low %v360, %v366
    %v384 = vcombine.low %v372, %v378
    %v386 = vunpack.c.l.s4 1966171168
    %v387 = vunpack.c.0.s8 %v386
    %v388 = vlaneseq
    %v389 = vshrl.u32 %v388, 7
    %v390 = vsub.s32 %v387, %v389
    %v391 = vrot.slane %v383, %v390
    %v393 = vunpack.c.l.s4 1966171168
    %v394 = vunpack.c.0.s8 %v393
    %v395 = vlaneseq
    %v396 = vshrl.u32 %v395, 7
    %v397 = vsub.s32 %v394, %v396
    %v398 = vrot.slane %v384, %v397
    %v399 = vcombine.low %v391, %v398
    %v401 = vunpack.c.l.s4 1966171168
    %v402 = vunpack.c.0.s8 %v401
    %v403 = vlaneseq
    %v404 = vshrl.u32 %v403, 7
    %v405 = vsub.s32 %v402, %v404
    %v406 = vrot.slane %v399, %v405
    %s408 = scalar_lea.vmem [#allocation11], 2
    %409 = vst.msk [vmem:[%s408] ss:$4 sm:$0xf] %vm294, %v406
    // Predicated region
    $region42: #{tpu_custom_call.1} parent=1 // pred_check
      _
    $region43: #{tpu_custom_call.1} parent=1 // pred_check_branch
      %411 = sbr.rel (0) target = $region45
    $region44: #{tpu_custom_call.1} parent=1 // pred_region
      %s413 = ssub.s32 256, 256
      %414 = vsyncadd [#allocation4], %s413
      %s416 = sshll.u32 [#allocation11], 4
      %s417 = int_to_ptr.vmem [resolvable:$true] %s416
      %419 = dma.vmem_to_hbm [thread:$0]  %s417, 256, %s5, [#allocation4]
    $region45: #{tpu_custom_call.1} parent=1 // pred_fallthru
      _
    // Predicated region
    $region46: #{tpu_custom_call.1} parent=1 // pred_check
      _
    $region47: #{tpu_custom_call.1} parent=1 // pred_check_branch
      %421 = sbr.rel (0) target = $region49
    $region48: #{tpu_custom_call.1} parent=1 // pred_region
      %422 = dma.done [#allocation4], 256
    $region49: #{tpu_custom_call.1} parent=1 // pred_fallthru
      _
    %423 = vsyncpa [#allocation3], 1
    %424 = vsyncpa [#allocation6], 1
    %425 = vsyncpa [#allocation9], 1
    %426 = vsyncpa [#allocation4], 1

</llo_original>
